<compile_context>
chip_gen: v7x
topology: tpu7x:2x2x1
jax: 0.10.0
libtpu: 0.0.40
codegen_flags: <defaults>
</compile_context>

<pallas_src>
import jax
import jax.numpy as jnp
from jax.experimental import pallas as pl
from jax.experimental.pallas import tpu as pltpu


D_IN, H1, H2, D_OUT = 8, 512, 256, 20
N_PAD = 128    # lane-dense padded output width (Q-values live in cols [:20])


def _cdiv(a, b):
    return -(-a // b)


def _round_up(a, b):
    return _cdiv(a, b) * b


def _mlp_kernel(x_ref, w1_ref, b1_ref, w2_ref, b2_ref, w3_ref, b3_ref, o_ref):
    # x_ref: (TB, 8) f32.  Layer 1: f32 MXU dot with K=8 (negligible cost, full
    # input precision).  Layers 2/3: bf16 operands on the MXU, f32 accumulation.
    # Bias-add / ReLU epilogue stays in f32 (v5e has no bf16 VPU path).
    h1 = jnp.dot(x_ref[...], w1_ref[...],
                 preferred_element_type=jnp.float32) + b1_ref[...]
    h1 = jnp.maximum(h1, 0.0).astype(jnp.bfloat16)

    h2 = jnp.dot(h1, w2_ref[...],
                 preferred_element_type=jnp.float32) + b2_ref[...]
    h2 = jnp.maximum(h2, 0.0).astype(jnp.bfloat16)

    # Layer 3: Linear(256 -> 128-padded), no activation. Real Q-values in cols [:20].
    o_ref[...] = jnp.dot(h2, w3_ref[...],
                         preferred_element_type=jnp.float32) + b3_ref[...]


def prepare_params(params):
    """One-time weight prep — call at init / whenever weights change, NOT per step.

    * W1/b1 stay f32 (layer-1 K=8 is free on the MXU; preserves input-layer precision).
    * W2/W3 cast to bf16 (halves resident-weight bytes / weight DMA).
    * W3/b3 zero-padded 20 -> 128 columns so the kernel store is a full unmasked
      lane-dense (TB, 128) tile.
    """
    w1, b1, w2, b2, w3, b3 = params
    w3p = jnp.zeros((H2, N_PAD), jnp.bfloat16).at[:, :D_OUT].set(
        w3.astype(jnp.bfloat16))
    b3p = jnp.zeros((1, N_PAD), jnp.float32).at[:, :D_OUT].set(
        b3.astype(jnp.float32))
    return (w1.astype(jnp.float32), b1.astype(jnp.float32),
            w2.astype(jnp.bfloat16), b2.astype(jnp.float32),
            w3p, b3p)


def _choose_tiling(B, *, tb_max=1024, want_grid=2):
    """Pick (TB, B_pad).

    TB is a multiple of 8, capped at tb_max, chosen so the grid has at least
    `want_grid` steps when B > 8 (keeps both v7x TensorCores busy and lets the
    input/output DMA pipeline against compute) while keeping batch-padding waste
    to < ~8 rows per grid step.
    """
    B8 = max(8, _round_up(B, 8))
    n_steps = max(want_grid, _cdiv(B8, tb_max))
    TB = min(tb_max, _round_up(_cdiv(B8, n_steps), 8))
    B_pad = _cdiv(B8, TB) * TB
    return TB, B_pad


def network_forward(x, prepped, *, tb_max=1024):
    """x: (B, 8) float32 -> (B, 20) float32 Q-values. `prepped` = prepare_params(params)."""
    w1, b1, w2, b2, w3p, b3p = prepped
    B = x.shape[0]
    TB, B_pad = _choose_tiling(B, tb_max=tb_max)

    xp = x.astype(jnp.float32)
    if B_pad != B:
        xp = jnp.pad(xp, ((0, B_pad - B), (0, 0)))

    const = lambda i: (0, 0)   # weights/biases: same block every grid step -> resident

    out = pl.pallas_call(
        _mlp_kernel,
        out_shape=jax.ShapeDtypeStruct((B_pad, N_PAD), jnp.float32),
        grid=(B_pad // TB,),
        in_specs=[
            pl.BlockSpec((TB, D_IN), lambda i: (i, 0)),   # x tile (pipelined, K=8)
            pl.BlockSpec((D_IN, H1), const),              # W1 (f32, resident)
            pl.BlockSpec((1, H1), const),                 # b1
            pl.BlockSpec((H1, H2), const),                # W2 (bf16, resident)
            pl.BlockSpec((1, H2), const),                 # b2
            pl.BlockSpec((H2, N_PAD), const),             # W3 (bf16, padded N)
            pl.BlockSpec((1, N_PAD), const),              # b3 (padded)
        ],
        out_specs=pl.BlockSpec((TB, N_PAD), lambda i: (i, 0)),
        compiler_params=pltpu.CompilerParams(
            dimension_semantics=("parallel",),            # megacore batch split (v7x)
        ),
    )(xp, w1, b1, w2, b2, w3p, b3p)

    return out[:B, :D_OUT]


def init_params(key):
    """Deterministic f32 init mirroring nn.Linear's U(-1/sqrt(fan_in), 1/sqrt(fan_in))."""
    dims = [(D_IN, H1), (H1, H2), (H2, D_OUT)]
    params = []
    keys = jax.random.split(key, 2 * len(dims))
    for idx, (fan_in, fan_out) in enumerate(dims):
        bound = 1.0 / (fan_in ** 0.5)
        w = jax.random.uniform(keys[2 * idx], (fan_in, fan_out),
                               minval=-bound, maxval=bound, dtype=jnp.float32)
        b = jax.random.uniform(keys[2 * idx + 1], (1, fan_out),
                               minval=-bound, maxval=bound, dtype=jnp.float32)
        params.extend([w, b])
    return tuple(params)


def reference_forward(x, params):
    """Pure-JAX reference mirroring the kernel's numerics:
    layer 1 in f32; layers 2/3 with bf16-rounded operands, f32 accumulation."""
    w1, b1, w2, b2, w3, b3 = params
    q = lambda a: a.astype(jnp.bfloat16).astype(jnp.float32)
    h1 = jnp.maximum(x @ w1 + b1, 0.0)
    h2 = jnp.maximum(q(h1) @ q(w2) + b2, 0.0)
    return q(h2) @ q(w3) + b3


if __name__ == "__main__":
    key = jax.random.PRNGKey(0)
    k_params, k_x = jax.random.split(key)

    params = init_params(k_params)
    prepped = prepare_params(params)      # one-time weight prep (hoisted out of forward)

    # 8-dim state vector (LunarLander-style DQN); small batch of 8 states.
    x = jax.random.normal(k_x, (8, D_IN), dtype=jnp.float32)

    fwd = jax.jit(network_forward)
    out = jax.block_until_ready(fwd(x, prepped))

    ref = reference_forward(x, params)
    assert out.shape == (8, D_OUT), out.shape
    assert jnp.allclose(out, ref, atol=1e-3, rtol=1e-3), "mismatch vs reference"

    print("KERNEL_OK")
</pallas_src>

<mosaic_0001>
module attributes {stable_mosaic.version = 11 : i64} {
  func.func @_mlp_kernel(%arg0: i32, %arg1: memref<8x8xf32, #tpu.memory_space<vmem>>, %arg2: memref<8x512xf32, #tpu.memory_space<vmem>>, %arg3: memref<1x512xf32, #tpu.memory_space<vmem>>, %arg4: memref<512x256xbf16, #tpu.memory_space<vmem>>, %arg5: memref<1x256xf32, #tpu.memory_space<vmem>>, %arg6: memref<256x128xbf16, #tpu.memory_space<vmem>>, %arg7: memref<1x128xf32, #tpu.memory_space<vmem>>, %arg8: memref<8x128xf32, #tpu.memory_space<vmem>>) attributes {dimension_semantics = [#tpu.dimension_semantics<parallel>], iteration_bounds = array<i64: 1>, scalar_prefetch = 0 : i64, scratch_operands = 0 : i64, tpu.core_type = #tpu.core_type<tc>, window_params = [{transform_indices = @transform_0, window_bounds = array<i64: 8, 8>}, {pipeline_mode = #tpu.pipeline_mode<synchronous>, transform_indices = @transform_1, window_bounds = array<i64: 8, 512>}, {pipeline_mode = #tpu.pipeline_mode<synchronous>, transform_indices = @transform_2, window_bounds = array<i64: 1, 512>}, {pipeline_mode = #tpu.pipeline_mode<synchronous>, transform_indices = @transform_3, window_bounds = array<i64: 512, 256>}, {pipeline_mode = #tpu.pipeline_mode<synchronous>, transform_indices = @transform_4, window_bounds = array<i64: 1, 256>}, {pipeline_mode = #tpu.pipeline_mode<synchronous>, transform_indices = @transform_5, window_bounds = array<i64: 256, 128>}, {pipeline_mode = #tpu.pipeline_mode<synchronous>, transform_indices = @transform_6, window_bounds = array<i64: 1, 128>}, {transform_indices = @transform_7, window_bounds = array<i64: 8, 128>}]} {
    %c0 = arith.constant 0 : index
    %c0_0 = arith.constant 0 : index
    %0 = vector.load %arg1[%c0, %c0_0] : memref<8x8xf32, #tpu.memory_space<vmem>>, vector<8x8xf32>
    %c0_1 = arith.constant 0 : index
    %c0_2 = arith.constant 0 : index
    %1 = vector.load %arg2[%c0_1, %c0_2] : memref<8x512xf32, #tpu.memory_space<vmem>>, vector<8x512xf32>
    %cst = arith.constant dense<0.000000e+00> : vector<8x512xf32>
    %2 = tpu.matmul %0, %1, %cst {dimension_numbers = #tpu.dot_dimension_numbers<[1], [0], [0], [1], [0, 0, 1, 1], [], []>} : vector<8x8xf32>, vector<8x512xf32>, vector<8x512xf32> -> vector<8x512xf32>
    %c0_3 = arith.constant 0 : index
    %c0_4 = arith.constant 0 : index
    %3 = vector.load %arg3[%c0_3, %c0_4] : memref<1x512xf32, #tpu.memory_space<vmem>>, vector<1x512xf32>
    %4 = vector.broadcast %3 : vector<1x512xf32> to vector<8x512xf32>
    %5 = arith.addf %2, %4 : vector<8x512xf32>
    %cst_5 = arith.constant 0.000000e+00 : f32
    %6 = vector.broadcast %cst_5 : f32 to vector<8x512xf32>
    %7 = arith.maximumf %5, %6 : vector<8x512xf32>
    %8 = arith.truncf %7 : vector<8x512xf32> to vector<8x512xbf16>
    %c0_6 = arith.constant 0 : index
    %c0_7 = arith.constant 0 : index
    %9 = vector.load %arg4[%c0_6, %c0_7] : memref<512x256xbf16, #tpu.memory_space<vmem>>, vector<512x256xbf16>
    %cst_8 = arith.constant dense<0.000000e+00> : vector<8x256xf32>
    %10 = tpu.matmul %8, %9, %cst_8 {dimension_numbers = #tpu.dot_dimension_numbers<[1], [0], [0], [1], [0, 0, 1, 1], [], []>} : vector<8x512xbf16>, vector<512x256xbf16>, vector<8x256xf32> -> vector<8x256xf32>
    %c0_9 = arith.constant 0 : index
    %c0_10 = arith.constant 0 : index
    %11 = vector.load %arg5[%c0_9, %c0_10] : memref<1x256xf32, #tpu.memory_space<vmem>>, vector<1x256xf32>
    %12 = vector.broadcast %11 : vector<1x256xf32> to vector<8x256xf32>
    %13 = arith.addf %10, %12 : vector<8x256xf32>
    %cst_11 = arith.constant 0.000000e+00 : f32
    %14 = vector.broadcast %cst_11 : f32 to vector<8x256xf32>
    %15 = arith.maximumf %13, %14 : vector<8x256xf32>
    %16 = arith.truncf %15 : vector<8x256xf32> to vector<8x256xbf16>
    %c0_12 = arith.constant 0 : index
    %c0_13 = arith.constant 0 : index
    %17 = vector.load %arg6[%c0_12, %c0_13] : memref<256x128xbf16, #tpu.memory_space<vmem>>, vector<256x128xbf16>
    %cst_14 = arith.constant dense<0.000000e+00> : vector<8x128xf32>
    %18 = tpu.matmul %16, %17, %cst_14 {dimension_numbers = #tpu.dot_dimension_numbers<[1], [0], [0], [1], [0, 0, 1, 1], [], []>} : vector<8x256xbf16>, vector<256x128xbf16>, vector<8x128xf32> -> vector<8x128xf32>
    %c0_15 = arith.constant 0 : index
    %c0_16 = arith.constant 0 : index
    %19 = vector.load %arg7[%c0_15, %c0_16] : memref<1x128xf32, #tpu.memory_space<vmem>>, vector<1x128xf32>
    %20 = vector.broadcast %19 : vector<1x128xf32> to vector<8x128xf32>
    %21 = arith.addf %18, %20 : vector<8x128xf32>
    %c0_17 = arith.constant 0 : index
    %c0_18 = arith.constant 0 : index
    %22 = vector.load %arg8[%c0_17, %c0_18] : memref<8x128xf32, #tpu.memory_space<vmem>>, vector<8x128xf32>
    tpu.vector_store %arg8[%c0_17, %c0_18], %21 {strides = array<i32>} : memref<8x128xf32, #tpu.memory_space<vmem>>, vector<8x128xf32>,
    return
  }
  func.func @transform_0(%arg0: i32) -> (i32, i32) {
    %c0_i32 = arith.constant 0 : i32
    %c0_i32_0 = arith.constant 0 : i32
    return %arg0, %c0_i32 : i32, i32
  }
  func.func @transform_1(%arg0: i32) -> (i32, i32) {
    %c0_i32 = arith.constant 0 : i32
    %c0_i32_0 = arith.constant 0 : i32
    %c0_i32_1 = arith.constant 0 : i32
    return %c0_i32, %c0_i32_0 : i32, i32
  }
  func.func @transform_2(%arg0: i32) -> (i32, i32) {
    %c0_i32 = arith.constant 0 : i32
    %c0_i32_0 = arith.constant 0 : i32
    %c0_i32_1 = arith.constant 0 : i32
    return %c0_i32, %c0_i32_0 : i32, i32
  }
  func.func @transform_3(%arg0: i32) -> (i32, i32) {
    %c0_i32 = arith.constant 0 : i32
    %c0_i32_0 = arith.constant 0 : i32
    %c0_i32_1 = arith.constant 0 : i32
    return %c0_i32, %c0_i32_0 : i32, i32
  }
  func.func @transform_4(%arg0: i32) -> (i32, i32) {
    %c0_i32 = arith.constant 0 : i32
    %c0_i32_0 = arith.constant 0 : i32
    %c0_i32_1 = arith.constant 0 : i32
    return %c0_i32, %c0_i32_0 : i32, i32
  }
  func.func @transform_5(%arg0: i32) -> (i32, i32) {
    %c0_i32 = arith.constant 0 : i32
    %c0_i32_0 = arith.constant 0 : i32
    %c0_i32_1 = arith.constant 0 : i32
    return %c0_i32, %c0_i32_0 : i32, i32
  }
  func.func @transform_6(%arg0: i32) -> (i32, i32) {
    %c0_i32 = arith.constant 0 : i32
    %c0_i32_0 = arith.constant 0 : i32
    %c0_i32_1 = arith.constant 0 : i32
    return %c0_i32, %c0_i32_0 : i32, i32
  }
  func.func @transform_7(%arg0: i32) -> (i32, i32) {
    %c0_i32 = arith.constant 0 : i32
    %c0_i32_0 = arith.constant 0 : i32
    return %arg0, %c0_i32 : i32, i32
  }
}

</mosaic_0001>

<llo_original>
// kernel: network_forward.1
$region0: #{network_forward.1}
  #allocation0 [shape = 'u32[]', space=smem, size = 0x4, offset = 0x4, fixed_abs, tag = 'smem constant byte address 0x4 - core index']
  #allocation1 [shape = 'u32[144,128]{1,0:T(1,128)}', space=vmem, size = 0x12000, scoped, tag = 'internal scratch']
  %s0 = inlined_call_operand.hbm [shape: f32[8,8], index: 0, kind: input, shape index: {}]
  %s1 = inlined_call_operand.hbm [shape: f32[8,512], index: 1, kind: input, shape index: {}]
  %s2 = inlined_call_operand.vmem [shape: f32[1,512], index: 2, kind: input, shape index: {}]
  %s3 = inlined_call_operand.hbm [shape: bf16[512,256], index: 3, kind: input, shape index: {}]
  %s4 = inlined_call_operand.vmem [shape: f32[1,256], index: 4, kind: input, shape index: {}]
  %s5 = inlined_call_operand.hbm [shape: bf16[256,128], index: 5, kind: input, shape index: {}]
  %s6 = inlined_call_operand.vmem [shape: f32[1,128], index: 6, kind: input, shape index: {}]
  %s7 = inlined_call_operand.hbm [shape: f32[8,128], index: 7, kind: output, shape index: {}]
  %s8 = sld [smem:[#allocation0]]
  $region54: #{network_forward.1} parent=0
    _
  %s10 = ssub.s32 1, %s8
  %s11 = scalar_select 0, %s10, %s8
  $region1: #{network_forward.1} parent=0
    #allocation2 [shape = 'u8[4096]{0}', space=vmem, size = 0x1000, scoped, tag = 'input window, operand 0, single buffered']
    #allocation3 [shape = 's32[1]{0}', space=sflag, size = 0x4, scoped, tag = 'scoped memory for network_forward.1']
    #allocation4 [shape = 's32[1]{0}', space=sflag, size = 0x4, scoped, tag = 'scoped memory for network_forward.1']
    #allocation5 [shape = 'u8[16384]{0}', space=vmem, size = 0x4000, scoped, tag = 'input window, operand 1, single buffered']
    #allocation6 [shape = 's32[1]{0}', space=sflag, size = 0x4, scoped, tag = 'scoped memory for network_forward.1']
    #allocation7 [shape = 'u8[262144]{0}', space=vmem, size = 0x40000, scoped, tag = 'input window, operand 3, single buffered']
    #allocation8 [shape = 'u8[65536]{0}', space=vmem, size = 0x10000, scoped, tag = 'input window, operand 5, single buffered']
    #allocation9 [shape = 's32[1]{0}', space=sflag, size = 0x4, scoped, tag = 'scoped memory for network_forward.1']
    #allocation10 [shape = 'u8[4096]{0}', space=vmem, size = 0x1000, scoped, tag = 'output window, operand 0, single buffered']
    %12 = vsyncpa [#allocation3], 0
    %13 = vsyncpa [#allocation6], 0
    %14 = vsyncpa [#allocation9], 0
    %15 = vsyncpa [#allocation4], 0
    // Predicated region
    $region2: #{network_forward.1} parent=1 // pred_check
      _
    $region3: #{network_forward.1} parent=1 // pred_check_branch
      %17 = sbr.rel (0) target = $region5
    $region4: #{network_forward.1} parent=1 // pred_region
      %s19 = ssub.s32 128, 128
      %20 = vsyncadd [#allocation3], %s19
      %s22 = sshll.u32 [#allocation2], 4
      %s23 = int_to_ptr.vmem [resolvable:$true] %s22
      %25 = dma.hbm_to_vmem [thread:$0]  %s0, 128, %s23, [#allocation3]
    $region5: #{network_forward.1} parent=1 // pred_fallthru
      _
    // Predicated region
    $region6: #{network_forward.1} parent=1 // pred_check
      _
    $region7: #{network_forward.1} parent=1 // pred_check_branch
      %27 = sbr.rel (0) target = $region9
    $region8: #{network_forward.1} parent=1 // pred_region
      %s29 = ssub.s32 512, 512
      %30 = vsyncadd [#allocation6], %s29
      %s32 = sshll.u32 [#allocation5], 4
      %s33 = int_to_ptr.vmem [resolvable:$true] %s32
      %35 = dma.hbm_to_vmem [thread:$0]  %s1, 512, %s33, [#allocation6]
    $region9: #{network_forward.1} parent=1 // pred_fallthru
      _
    // Predicated region
    $region10: #{network_forward.1} parent=1 // pred_check
      _
    $region11: #{network_forward.1} parent=1 // pred_check_branch
      %37 = sbr.rel (0) target = $region13
    $region12: #{network_forward.1} parent=1 // pred_region
      _
    $region13: #{network_forward.1} parent=1 // pred_fallthru
      _
    // Predicated region
    $region14: #{network_forward.1} parent=1 // pred_check
      _
    $region15: #{network_forward.1} parent=1 // pred_check_branch
      %39 = sbr.rel (0) target = $region17
    $region16: #{network_forward.1} parent=1 // pred_region
      %s41 = ssub.s32 8192, 8192
      %42 = vsyncadd [#allocation6], %s41
      %s43 = sshll.u32 [#allocation7], 4
      %s44 = int_to_ptr.vmem [resolvable:$true] %s43
      %49 = dma.hbm_to_vmem [thread:$0]  %s3, 8192, %s44, [#allocation6], 128, 128, 8
    $region17: #{network_forward.1} parent=1 // pred_fallthru
      _
    // Predicated region
    $region18: #{network_forward.1} parent=1 // pred_check
      _
    $region19: #{network_forward.1} parent=1 // pred_check_branch
      %51 = sbr.rel (0) target = $region21
    $region20: #{network_forward.1} parent=1 // pred_region
      _
    $region21: #{network_forward.1} parent=1 // pred_fallthru
      _
    // Predicated region
    $region22: #{network_forward.1} parent=1 // pred_check
      _
    $region23: #{network_forward.1} parent=1 // pred_check_branch
      %53 = sbr.rel (0) target = $region25
    $region24: #{network_forward.1} parent=1 // pred_region
      %s55 = ssub.s32 2048, 2048
      %56 = vsyncadd [#allocation9], %s55
      %s57 = sshll.u32 [#allocation8], 4
      %s58 = int_to_ptr.vmem [resolvable:$true] %s57
      %63 = dma.hbm_to_vmem [thread:$0]  %s5, 2048, %s58, [#allocation9], 64, 64, 4
    $region25: #{network_forward.1} parent=1 // pred_fallthru
      _
    // Predicated region
    $region26: #{network_forward.1} parent=1 // pred_check
      _
    $region27: #{network_forward.1} parent=1 // pred_check_branch
      %65 = sbr.rel (0) target = $region29
    $region28: #{network_forward.1} parent=1 // pred_region
      _
    $region29: #{network_forward.1} parent=1 // pred_fallthru
      _
    // Predicated region
    $region30: #{network_forward.1} parent=1 // pred_check
      _
    $region31: #{network_forward.1} parent=1 // pred_check_branch
      %67 = sbr.rel (0) target = $region33
    $region32: #{network_forward.1} parent=1 // pred_region
      %68 = dma.done [#allocation3], 128
    $region33: #{network_forward.1} parent=1 // pred_fallthru
      _
    // Predicated region
    $region34: #{network_forward.1} parent=1 // pred_check
      _
    $region35: #{network_forward.1} parent=1 // pred_check_branch
      %70 = sbr.rel (0) target = $region37
    $region36: #{network_forward.1} parent=1 // pred_region
      %71 = dma.done [#allocation6], 512
    $region37: #{network_forward.1} parent=1 // pred_fallthru
      _
    // Predicated region
    $region38: #{network_forward.1} parent=1 // pred_check
      _
    $region39: #{network_forward.1} parent=1 // pred_check_branch
      %73 = sbr.rel (0) target = $region41
    $region40: #{network_forward.1} parent=1 // pred_region
      %74 = dma.done [#allocation6], 8192
    $region41: #{network_forward.1} parent=1 // pred_fallthru
      _
    // Predicated region
    $region42: #{network_forward.1} parent=1 // pred_check
      _
    $region43: #{network_forward.1} parent=1 // pred_check_branch
      %76 = sbr.rel (0) target = $region45
    $region44: #{network_forward.1} parent=1 // pred_region
      %77 = dma.done [#allocation9], 2048
    $region45: #{network_forward.1} parent=1 // pred_fallthru
      _
    %v79 = vld [vmem:[#allocation2] sm:$0xff]
    %v80 = vld [vmem:[#allocation5] sm:$0xff]
    %v81 = vld [vmem:[#allocation5 + $0x8] sm:$0xff]
    %v82 = vld [vmem:[#allocation5 + $0x10] sm:$0xff]
    %v83 = vld [vmem:[#allocation5 + $0x18] sm:$0xff]
    %v84 = vld [vmem:[%s2] sm:$0xf]
    %v86 = vlaneseq
    %v87 = vshrl.u32 %v86, 7
    %v88 = vsub.s32 0, %v87
    %v89 = vrot.slane %v84, %v88
    %v90 = vlaneseq
    %v91 = vshrl.u32 %v90, 7
    %v92 = vsub.s32 1, %v91
    %v93 = vrot.slane %v84, %v92
    %v94 = vlaneseq
    %v95 = vshrl.u32 %v94, 7
    %v96 = vsub.s32 2, %v95
    %v97 = vrot.slane %v84, %v96
    %v98 = vlaneseq
    %v99 = vshrl.u32 %v98, 7
    %v100 = vsub.s32 3, %v99
    %v101 = vrot.slane %v84, %v100
    %vm106 = vcmask 64512
    %v108 = vsel %vm106, %v79, 0
    %110 = vmatprep.subr.mxu0 %v81
    %111 = vmatpush1.msra.mxu0 %v80
    %112 = vmatprep.subr.mxu0 0.0
    %113 = vmatpush1.msra.mxu0 0.0
    %114 = vmatprep.subr.mxu0 0.0
    %115 = vmatpush1.msra.mxu0 0.0
    %116 = vmatprep.subr.mxu0 0.0
    %117 = vmatpush1.msra.mxu0 0.0
    %118 = vmatprep.subr.mxu0 0.0
    %119 = vmatpush1.msra.mxu0 0.0
    %120 = vmatprep.subr.mxu0 0.0
    %121 = vmatpush1.msra.mxu0 0.0
    %122 = vmatprep.subr.mxu0 0.0
    %123 = vmatpush1.msra.mxu0 0.0
    %124 = vmatprep.subr.mxu0 0.0
    %125 = vmatpush1.msra.mxu0 0.0
    %126 = vmatprep.subr.mxu0 0.0
    %127 = vmatpush1.msra.mxu0 0.0
    %128 = vmatprep.subr.mxu0 0.0
    %129 = vmatpush1.msra.mxu0 0.0
    %130 = vmatprep.subr.mxu0 0.0
    %131 = vmatpush1.msra.mxu0 0.0
    %132 = vmatprep.subr.mxu0 0.0
    %133 = vmatpush1.msra.mxu0 0.0
    %134 = vmatprep.subr.mxu0 0.0
    %135 = vmatpush1.msra.mxu0 0.0
    %136 = vmatprep.subr.mxu0 0.0
    %137 = vmatpush1.msra.mxu0 0.0
    %138 = vmatprep.subr.mxu0 0.0
    %139 = vmatpush1.msra.mxu0 0.0
    %140 = vmatprep.subr.mxu0 0.0
    %141 = vmatpush1.msra.mxu0 0.0
    %142 = vmatprep.subr.mxu0 0.0
    %143 = vmatpush1.msra.mxu0 0.0
    %144 = vmatprep.subr.mxu0 0.0
    %145 = vmatpush1.msra.mxu0 0.0
    %146 = vmatprep.subr.mxu0 0.0
    %147 = vmatpush1.msra.mxu0 0.0
    %148 = vmatprep.subr.mxu0 0.0
    %149 = vmatpush1.msra.mxu0 0.0
    %150 = vmatprep.subr.mxu0 0.0
    %151 = vmatpush1.msra.mxu0 0.0
    %152 = vmatprep.subr.mxu0 0.0
    %153 = vmatpush1.msra.mxu0 0.0
    %154 = vmatprep.subr.mxu0 0.0
    %155 = vmatpush1.msra.mxu0 0.0
    %156 = vmatprep.subr.mxu0 0.0
    %157 = vmatpush1.msra.mxu0 0.0
    %158 = vmatprep.subr.mxu0 0.0
    %159 = vmatpush1.msra.mxu0 0.0
    %160 = vmatprep.subr.mxu0 0.0
    %161 = vmatpush1.msra.mxu0 0.0
    %162 = vmatprep.subr.mxu0 0.0
    %163 = vmatpush1.msra.mxu0 0.0
    %164 = vmatprep.subr.mxu0 0.0
    %165 = vmatpush1.msra.mxu0 0.0
    %166 = vmatprep.subr.mxu0 0.0
    %167 = vmatpush1.msra.mxu0 0.0
    %168 = vmatprep.subr.mxu0 0.0
    %169 = vmatpush1.msra.mxu0 0.0
    %170 = vmatprep.subr.mxu0 0.0
    %171 = vmatpush1.msra.mxu0 0.0
    %172 = vmatprep.subr.mxu0 0.0
    %173 = vmatpush1.msra.mxu0 0.0
    %174 = vmatprep.mubr.f32.mxu0 0.0
    %175 = vmatmul.mubr.f32.gmra.mrb[0].mxu0 %v108
    %v176 = vpop.f32.mrb[0].mxu0
    %v177 = vadd.f32 %v89, %v176
    %v178 = vpop.f32.mrb[0].mxu0
    %v179 = vadd.f32 %v93, %v178
    %180 = vdwg.mxu0
    %181 = vmatprep.subr.mxu0 %v83
    %182 = vmatpush1.msra.mxu0 %v82
    %183 = vmatprep.subr.mxu0 0.0
    %184 = vmatpush1.msra.mxu0 0.0
    %185 = vmatprep.subr.mxu0 0.0
    %186 = vmatpush1.msra.mxu0 0.0
    %187 = vmatprep.subr.mxu0 0.0
    %188 = vmatpush1.msra.mxu0 0.0
    %189 = vmatprep.subr.mxu0 0.0
    %190 = vmatpush1.msra.mxu0 0.0
    %191 = vmatprep.subr.mxu0 0.0
    %192 = vmatpush1.msra.mxu0 0.0
    %193 = vmatprep.subr.mxu0 0.0
    %194 = vmatpush1.msra.mxu0 0.0
    %195 = vmatprep.subr.mxu0 0.0
    %196 = vmatpush1.msra.mxu0 0.0
    %197 = vmatprep.subr.mxu0 0.0
    %198 = vmatpush1.msra.mxu0 0.0
    %199 = vmatprep.subr.mxu0 0.0
    %200 = vmatpush1.msra.mxu0 0.0
    %201 = vmatprep.subr.mxu0 0.0
    %202 = vmatpush1.msra.mxu0 0.0
    %203 = vmatprep.subr.mxu0 0.0
    %204 = vmatpush1.msra.mxu0 0.0
    %205 = vmatprep.subr.mxu0 0.0
    %206 = vmatpush1.msra.mxu0 0.0
    %207 = vmatprep.subr.mxu0 0.0
    %208 = vmatpush1.msra.mxu0 0.0
    %209 = vmatprep.subr.mxu0 0.0
    %210 = vmatpush1.msra.mxu0 0.0
    %211 = vmatprep.subr.mxu0 0.0
    %212 = vmatpush1.msra.mxu0 0.0
    %213 = vmatprep.subr.mxu0 0.0
    %214 = vmatpush1.msra.mxu0 0.0
    %215 = vmatprep.subr.mxu0 0.0
    %216 = vmatpush1.msra.mxu0 0.0
    %217 = vmatprep.subr.mxu0 0.0
    %218 = vmatpush1.msra.mxu0 0.0
    %219 = vmatprep.subr.mxu0 0.0
    %220 = vmatpush1.msra.mxu0 0.0
    %221 = vmatprep.subr.mxu0 0.0
    %222 = vmatpush1.msra.mxu0 0.0
    %223 = vmatprep.subr.mxu0 0.0
    %224 = vmatpush1.msra.mxu0 0.0
    %225 = vmatprep.subr.mxu0 0.0
    %226 = vmatpush1.msra.mxu0 0.0
    %227 = vmatprep.subr.mxu0 0.0
    %228 = vmatpush1.msra.mxu0 0.0
    %229 = vmatprep.subr.mxu0 0.0
    %230 = vmatpush1.msra.mxu0 0.0
    %231 = vmatprep.subr.mxu0 0.0
    %232 = vmatpush1.msra.mxu0 0.0
    %233 = vmatprep.subr.mxu0 0.0
    %234 = vmatpush1.msra.mxu0 0.0
    %235 = vmatprep.subr.mxu0 0.0
    %236 = vmatpush1.msra.mxu0 0.0
    %237 = vmatprep.subr.mxu0 0.0
    %238 = vmatpush1.msra.mxu0 0.0
    %239 = vmatprep.subr.mxu0 0.0
    %240 = vmatpush1.msra.mxu0 0.0
    %241 = vmatprep.subr.mxu0 0.0
    %242 = vmatpush1.msra.mxu0 0.0
    %243 = vmatprep.subr.mxu0 0.0
    %244 = vmatpush1.msra.mxu0 0.0
    %245 = vmatprep.mubr.f32.mxu0 0.0
    %246 = vmatmul.mubr.f32.gmra.mrb[0].mxu0 %v108
    %v247 = vpop.f32.mrb[0].mxu0
    %v248 = vadd.f32 %v97, %v247
    %v249 = vpop.f32.mrb[0].mxu0
    %v250 = vadd.f32 %v101, %v249
    %251 = vdwg.mxu0
    %v252 = vmax.f32 %v177, 0.0
    %v253 = vmax.f32 %v179, 0.0
    %v254 = vmax.f32 %v248, 0.0
    %v255 = vmax.f32 %v250, 0.0
    %v256 = vpack.c.bf16 %v252, %v252
    %v257 = vpack.c.bf16 %v253, %v253
    %v258 = vpack.c.bf16 %v254, %v254
    %v259 = vpack.c.bf16 %v255, %v255
    %v260 = vld [vmem:[#allocation7] sm:$0xff]
    %v261 = vld [vmem:[#allocation7 + $0x8] sm:$0xff]
    %v262 = vld [vmem:[#allocation7 + $0x10] sm:$0xff]
    %v263 = vld [vmem:[#allocation7 + $0x18] sm:$0xff]
    %v264 = vld [vmem:[#allocation7 + $0x20] sm:$0xff]
    %v265 = vld [vmem:[#allocation7 + $0x28] sm:$0xff]
    %v266 = vld [vmem:[#allocation7 + $0x30] sm:$0xff]
    %v267 = vld [vmem:[#allocation7 + $0x38] sm:$0xff]
    %v268 = vld [vmem:[#allocation7 + $0x40] sm:$0xff]
    %v269 = vld [vmem:[#allocation7 + $0x48] sm:$0xff]
    %v270 = vld [vmem:[#allocation7 + $0x50] sm:$0xff]
    %v271 = vld [vmem:[#allocation7 + $0x58] sm:$0xff]
    %v272 = vld [vmem:[#allocation7 + $0x60] sm:$0xff]
    %v273 = vld [vmem:[#allocation7 + $0x68] sm:$0xff]
    %v274 = vld [vmem:[#allocation7 + $0x70] sm:$0xff]
    %v275 = vld [vmem:[#allocation7 + $0x78] sm:$0xff]
    %v276 = vld [vmem:[#allocation7 + $0x80] sm:$0xff]
    %v277 = vld [vmem:[#allocation7 + $0x88] sm:$0xff]
    %v278 = vld [vmem:[#allocation7 + $0x90] sm:$0xff]
    %v279 = vld [vmem:[#allocation7 + $0x98] sm:$0xff]
    %v280 = vld [vmem:[#allocation7 + $0xa0] sm:$0xff]
    %v281 = vld [vmem:[#allocation7 + $0xa8] sm:$0xff]
    %v282 = vld [vmem:[#allocation7 + $0xb0] sm:$0xff]
    %v283 = vld [vmem:[#allocation7 + $0xb8] sm:$0xff]
    %v284 = vld [vmem:[#allocation7 + $0xc0] sm:$0xff]
    %v285 = vld [vmem:[#allocation7 + $0xc8] sm:$0xff]
    %v286 = vld [vmem:[#allocation7 + $0xd0] sm:$0xff]
    %v287 = vld [vmem:[#allocation7 + $0xd8] sm:$0xff]
    %v288 = vld [vmem:[#allocation7 + $0xe0] sm:$0xff]
    %v289 = vld [vmem:[#allocation7 + $0xe8] sm:$0xff]
    %v290 = vld [vmem:[#allocation7 + $0xf0] sm:$0xff]
    %v291 = vld [vmem:[#allocation7 + $0xf8] sm:$0xff]
    %v292 = vld [vmem:[#allocation7 + $0x100] sm:$0xff]
    %v293 = vld [vmem:[#allocation7 + $0x108] sm:$0xff]
    %v294 = vld [vmem:[#allocation7 + $0x110] sm:$0xff]
    %v295 = vld [vmem:[#allocation7 + $0x118] sm:$0xff]
    %v296 = vld [vmem:[#allocation7 + $0x120] sm:$0xff]
    %v297 = vld [vmem:[#allocation7 + $0x128] sm:$0xff]
    %v298 = vld [vmem:[#allocation7 + $0x130] sm:$0xff]
    %v299 = vld [vmem:[#allocation7 + $0x138] sm:$0xff]
    %v300 = vld [vmem:[#allocation7 + $0x140] sm:$0xff]
    %v301 = vld [vmem:[#allocation7 + $0x148] sm:$0xff]
    %v302 = vld [vmem:[#allocation7 + $0x150] sm:$0xff]
    %v303 = vld [vmem:[#allocation7 + $0x158] sm:$0xff]
    %v304 = vld [vmem:[#allocation7 + $0x160] sm:$0xff]
    %v305 = vld [vmem:[#allocation7 + $0x168] sm:$0xff]
    %v306 = vld [vmem:[#allocation7 + $0x170] sm:$0xff]
    %v307 = vld [vmem:[#allocation7 + $0x178] sm:$0xff]
    %v308 = vld [vmem:[#allocation7 + $0x180] sm:$0xff]
    %v309 = vld [vmem:[#allocation7 + $0x188] sm:$0xff]
    %v310 = vld [vmem:[#allocation7 + $0x190] sm:$0xff]
    %v311 = vld [vmem:[#allocation7 + $0x198] sm:$0xff]
    %v312 = vld [vmem:[#allocation7 + $0x1a0] sm:$0xff]
    %v313 = vld [vmem:[#allocation7 + $0x1a8] sm:$0xff]
    %v314 = vld [vmem:[#allocation7 + $0x1b0] sm:$0xff]
    %v315 = vld [vmem:[#allocation7 + $0x1b8] sm:$0xff]
    %v316 = vld [vmem:[#allocation7 + $0x1c0] sm:$0xff]
    %v317 = vld [vmem:[#allocation7 + $0x1c8] sm:$0xff]
    %v318 = vld [vmem:[#allocation7 + $0x1d0] sm:$0xff]
    %v319 = vld [vmem:[#allocation7 + $0x1d8] sm:$0xff]
    %v320 = vld [vmem:[#allocation7 + $0x1e0] sm:$0xff]
    %v321 = vld [vmem:[#allocation7 + $0x1e8] sm:$0xff]
    %v322 = vld [vmem:[#allocation7 + $0x1f0] sm:$0xff]
    %v323 = vld [vmem:[#allocation7 + $0x1f8] sm:$0xff]
    %v324 = vld [vmem:[%s4] sm:$0x3]
    %v326 = vlaneseq
    %v327 = vshrl.u32 %v326, 7
    %v328 = vsub.s32 0, %v327
    %v329 = vrot.slane %v324, %v328
    %v330 = vlaneseq
    %v331 = vshrl.u32 %v330, 7
    %v332 = vsub.s32 1, %v331
    %v333 = vrot.slane %v324, %v332
    %v400 = vunpack.c.l.b16 %v260
    %v401 = vunpack.c.h.b16 %v260
    %v402 = vunpack.c.l.b16 %v261
    %v403 = vunpack.c.h.b16 %v261
    %v404 = vunpack.c.l.b16 %v262
    %v405 = vunpack.c.h.b16 %v262
    %v406 = vunpack.c.l.b16 %v263
    %v407 = vunpack.c.h.b16 %v263
    %v408 = vunpack.c.l.b16 %v264
    %v409 = vunpack.c.h.b16 %v264
    %v410 = vunpack.c.l.b16 %v265
    %v411 = vunpack.c.h.b16 %v265
    %v412 = vunpack.c.l.b16 %v266
    %v413 = vunpack.c.h.b16 %v266
    %v414 = vunpack.c.l.b16 %v267
    %v415 = vunpack.c.h.b16 %v267
    %v416 = vunpack.c.l.b16 %v268
    %v417 = vunpack.c.h.b16 %v268
    %v418 = vunpack.c.l.b16 %v269
    %v419 = vunpack.c.h.b16 %v269
    %v420 = vunpack.c.l.b16 %v270
    %v421 = vunpack.c.h.b16 %v270
    %v422 = vunpack.c.l.b16 %v271
    %v423 = vunpack.c.h.b16 %v271
    %v424 = vunpack.c.l.b16 %v272
    %v425 = vunpack.c.h.b16 %v272
    %v426 = vunpack.c.l.b16 %v273
    %v427 = vunpack.c.h.b16 %v273
    %v428 = vunpack.c.l.b16 %v274
    %v429 = vunpack.c.h.b16 %v274
    %v430 = vunpack.c.l.b16 %v275
    %v431 = vunpack.c.h.b16 %v275
    %v432 = vunpack.c.l.b16 %v276
    %v433 = vunpack.c.h.b16 %v276
    %v434 = vunpack.c.l.b16 %v277
    %v435 = vunpack.c.h.b16 %v277
    %v436 = vunpack.c.l.b16 %v278
    %v437 = vunpack.c.h.b16 %v278
    %v438 = vunpack.c.l.b16 %v279
    %v439 = vunpack.c.h.b16 %v279
    %v440 = vunpack.c.l.b16 %v280
    %v441 = vunpack.c.h.b16 %v280
    %v442 = vunpack.c.l.b16 %v281
    %v443 = vunpack.c.h.b16 %v281
    %v444 = vunpack.c.l.b16 %v282
    %v445 = vunpack.c.h.b16 %v282
    %v446 = vunpack.c.l.b16 %v283
    %v447 = vunpack.c.h.b16 %v283
    %v448 = vunpack.c.l.b16 %v284
    %v449 = vunpack.c.h.b16 %v284
    %v450 = vunpack.c.l.b16 %v285
    %v451 = vunpack.c.h.b16 %v285
    %v452 = vunpack.c.l.b16 %v286
    %v453 = vunpack.c.h.b16 %v286
    %v454 = vunpack.c.l.b16 %v287
    %v455 = vunpack.c.h.b16 %v287
    %v456 = vunpack.c.l.b16 %v288
    %v457 = vunpack.c.h.b16 %v288
    %v458 = vunpack.c.l.b16 %v289
    %v459 = vunpack.c.h.b16 %v289
    %v460 = vunpack.c.l.b16 %v290
    %v461 = vunpack.c.h.b16 %v290
    %v462 = vunpack.c.l.b16 %v291
    %v463 = vunpack.c.h.b16 %v291
    %v464 = vunpack.c.l.b16 %v292
    %v465 = vunpack.c.h.b16 %v292
    %v466 = vunpack.c.l.b16 %v293
    %v467 = vunpack.c.h.b16 %v293
    %v468 = vunpack.c.l.b16 %v294
    %v469 = vunpack.c.h.b16 %v294
    %v470 = vunpack.c.l.b16 %v295
    %v471 = vunpack.c.h.b16 %v295
    %v472 = vunpack.c.l.b16 %v296
    %v473 = vunpack.c.h.b16 %v296
    %v474 = vunpack.c.l.b16 %v297
    %v475 = vunpack.c.h.b16 %v297
    %v476 = vunpack.c.l.b16 %v298
    %v477 = vunpack.c.h.b16 %v298
    %v478 = vunpack.c.l.b16 %v299
    %v479 = vunpack.c.h.b16 %v299
    %v480 = vunpack.c.l.b16 %v300
    %v481 = vunpack.c.h.b16 %v300
    %v482 = vunpack.c.l.b16 %v301
    %v483 = vunpack.c.h.b16 %v301
    %v484 = vunpack.c.l.b16 %v302
    %v485 = vunpack.c.h.b16 %v302
    %v486 = vunpack.c.l.b16 %v303
    %v487 = vunpack.c.h.b16 %v303
    %v488 = vunpack.c.l.b16 %v304
    %v489 = vunpack.c.h.b16 %v304
    %v490 = vunpack.c.l.b16 %v305
    %v491 = vunpack.c.h.b16 %v305
    %v492 = vunpack.c.l.b16 %v306
    %v493 = vunpack.c.h.b16 %v306
    %v494 = vunpack.c.l.b16 %v307
    %v495 = vunpack.c.h.b16 %v307
    %v496 = vunpack.c.l.b16 %v308
    %v497 = vunpack.c.h.b16 %v308
    %v498 = vunpack.c.l.b16 %v309
    %v499 = vunpack.c.h.b16 %v309
    %v500 = vunpack.c.l.b16 %v310
    %v501 = vunpack.c.h.b16 %v310
    %v502 = vunpack.c.l.b16 %v311
    %v503 = vunpack.c.h.b16 %v311
    %v504 = vunpack.c.l.b16 %v312
    %v505 = vunpack.c.h.b16 %v312
    %v506 = vunpack.c.l.b16 %v313
    %v507 = vunpack.c.h.b16 %v313
    %v508 = vunpack.c.l.b16 %v314
    %v509 = vunpack.c.h.b16 %v314
    %v510 = vunpack.c.l.b16 %v315
    %v511 = vunpack.c.h.b16 %v315
    %v512 = vunpack.c.l.b16 %v316
    %v513 = vunpack.c.h.b16 %v316
    %v514 = vunpack.c.l.b16 %v317
    %v515 = vunpack.c.h.b16 %v317
    %v516 = vunpack.c.l.b16 %v318
    %v517 = vunpack.c.h.b16 %v318
    %v518 = vunpack.c.l.b16 %v319
    %v519 = vunpack.c.h.b16 %v319
    %v520 = vunpack.c.l.b16 %v320
    %v521 = vunpack.c.h.b16 %v320
    %v522 = vunpack.c.l.b16 %v321
    %v523 = vunpack.c.h.b16 %v321
    %v524 = vunpack.c.l.b16 %v322
    %v525 = vunpack.c.h.b16 %v322
    %v526 = vunpack.c.l.b16 %v323
    %v527 = vunpack.c.h.b16 %v323
    %v528 = vpack.c.b16 %v402, %v400
    %v529 = vpack.c.b16 %v403, %v401
    %v530 = vpack.c.b16 %v406, %v404
    %v531 = vpack.c.b16 %v407, %v405
    %v532 = vpack.c.b16 %v410, %v408
    %v533 = vpack.c.b16 %v411, %v409
    %v534 = vpack.c.b16 %v414, %v412
    %v535 = vpack.c.b16 %v415, %v413
    %v536 = vpack.c.b16 %v418, %v416
    %v537 = vpack.c.b16 %v419, %v417
    %v538 = vpack.c.b16 %v422, %v420
    %v539 = vpack.c.b16 %v423, %v421
    %v540 = vpack.c.b16 %v426, %v424
    %v541 = vpack.c.b16 %v427, %v425
    %v542 = vpack.c.b16 %v430, %v428
    %v543 = vpack.c.b16 %v431, %v429
    %v544 = vpack.c.b16 %v434, %v432
    %v545 = vpack.c.b16 %v435, %v433
    %v546 = vpack.c.b16 %v438, %v436
    %v547 = vpack.c.b16 %v439, %v437
    %v548 = vpack.c.b16 %v442, %v440
    %v549 = vpack.c.b16 %v443, %v441
    %v550 = vpack.c.b16 %v446, %v444
    %v551 = vpack.c.b16 %v447, %v445
    %v552 = vpack.c.b16 %v450, %v448
    %v553 = vpack.c.b16 %v451, %v449
    %v554 = vpack.c.b16 %v454, %v452
    %v555 = vpack.c.b16 %v455, %v453
    %v556 = vpack.c.b16 %v458, %v456
    %v557 = vpack.c.b16 %v459, %v457
    %v558 = vpack.c.b16 %v462, %v460
    %v559 = vpack.c.b16 %v463, %v461
    %v560 = vpack.c.b16 %v466, %v464
    %v561 = vpack.c.b16 %v467, %v465
    %v562 = vpack.c.b16 %v470, %v468
    %v563 = vpack.c.b16 %v471, %v469
    %v564 = vpack.c.b16 %v474, %v472
    %v565 = vpack.c.b16 %v475, %v473
    %v566 = vpack.c.b16 %v478, %v476
    %v567 = vpack.c.b16 %v479, %v477
    %v568 = vpack.c.b16 %v482, %v480
    %v569 = vpack.c.b16 %v483, %v481
    %v570 = vpack.c.b16 %v486, %v484
    %v571 = vpack.c.b16 %v487, %v485
    %v572 = vpack.c.b16 %v490, %v488
    %v573 = vpack.c.b16 %v491, %v489
    %v574 = vpack.c.b16 %v494, %v492
    %v575 = vpack.c.b16 %v495, %v493
    %v576 = vpack.c.b16 %v498, %v496
    %v577 = vpack.c.b16 %v499, %v497
    %v578 = vpack.c.b16 %v502, %v500
    %v579 = vpack.c.b16 %v503, %v501
    %v580 = vpack.c.b16 %v506, %v504
    %v581 = vpack.c.b16 %v507, %v505
    %v582 = vpack.c.b16 %v510, %v508
    %v583 = vpack.c.b16 %v511, %v509
    %v584 = vpack.c.b16 %v514, %v512
    %v585 = vpack.c.b16 %v515, %v513
    %v586 = vpack.c.b16 %v518, %v516
    %v587 = vpack.c.b16 %v519, %v517
    %v588 = vpack.c.b16 %v522, %v520
    %v589 = vpack.c.b16 %v523, %v521
    %v590 = vpack.c.b16 %v526, %v524
    %v591 = vpack.c.b16 %v527, %v525
    %656 = vmatprep.subr.bf16.mxu0 %v529
    %657 = vmatpush1.bf16.msra.mxu0 %v528
    %658 = vmatprep.subr.bf16.mxu0 %v531
    %659 = vmatpush1.bf16.msra.mxu0 %v530
    %660 = vmatprep.subr.bf16.mxu0 %v533
    %661 = vmatpush1.bf16.msra.mxu0 %v532
    %662 = vmatprep.subr.bf16.mxu0 %v535
    %663 = vmatpush1.bf16.msra.mxu0 %v534
    %664 = vmatprep.subr.bf16.mxu0 %v537
    %665 = vmatpush1.bf16.msra.mxu0 %v536
    %666 = vmatprep.subr.bf16.mxu0 %v539
    %667 = vmatpush1.bf16.msra.mxu0 %v538
    %668 = vmatprep.subr.bf16.mxu0 %v541
    %669 = vmatpush1.bf16.msra.mxu0 %v540
    %670 = vmatprep.subr.bf16.mxu0 %v543
    %671 = vmatpush1.bf16.msra.mxu0 %v542
    %672 = vmatprep.subr.bf16.mxu0 %v545
    %673 = vmatpush1.bf16.msra.mxu0 %v544
    %674 = vmatprep.subr.bf16.mxu0 %v547
    %675 = vmatpush1.bf16.msra.mxu0 %v546
    %676 = vmatprep.subr.bf16.mxu0 %v549
    %677 = vmatpush1.bf16.msra.mxu0 %v548
    %678 = vmatprep.subr.bf16.mxu0 %v551
    %679 = vmatpush1.bf16.msra.mxu0 %v550
    %680 = vmatprep.subr.bf16.mxu0 %v553
    %681 = vmatpush1.bf16.msra.mxu0 %v552
    %682 = vmatprep.subr.bf16.mxu0 %v555
    %683 = vmatpush1.bf16.msra.mxu0 %v554
    %684 = vmatprep.subr.bf16.mxu0 %v557
    %685 = vmatpush1.bf16.msra.mxu0 %v556
    %686 = vmatprep.subr.bf16.mxu0 %v559
    %687 = vmatpush1.bf16.msra.mxu0 %v558
    %688 = vmatprep.mubr.bf16.mxu0 %v257
    %689 = vmatmul.mubr.bf16.gmra.mrb[0].mxu0 %v256
    %v690 = vpop.f32.mrb[0].mxu0
    %v691 = vadd.f32 %v329, %v690
    %v692 = vpop.f32.mrb[0].mxu0
    %v693 = vadd.f32 %v333, %v692
    %v694 = vpop.f32.mrb[0].mxu0
    %v695 = vpop.f32.mrb[0].mxu0
    %696 = vdwg.mxu0
    %697 = vmatprep.subr.bf16.mxu0 %v561
    %698 = vmatpush1.bf16.msra.mxu0 %v560
    %699 = vmatprep.subr.bf16.mxu0 %v563
    %700 = vmatpush1.bf16.msra.mxu0 %v562
    %701 = vmatprep.subr.bf16.mxu0 %v565
    %702 = vmatpush1.bf16.msra.mxu0 %v564
    %703 = vmatprep.subr.bf16.mxu0 %v567
    %704 = vmatpush1.bf16.msra.mxu0 %v566
    %705 = vmatprep.subr.bf16.mxu0 %v569
    %706 = vmatpush1.bf16.msra.mxu0 %v568
    %707 = vmatprep.subr.bf16.mxu0 %v571
    %708 = vmatpush1.bf16.msra.mxu0 %v570
    %709 = vmatprep.subr.bf16.mxu0 %v573
    %710 = vmatpush1.bf16.msra.mxu0 %v572
    %711 = vmatprep.subr.bf16.mxu0 %v575
    %712 = vmatpush1.bf16.msra.mxu0 %v574
    %713 = vmatprep.subr.bf16.mxu0 %v577
    %714 = vmatpush1.bf16.msra.mxu0 %v576
    %715 = vmatprep.subr.bf16.mxu0 %v579
    %716 = vmatpush1.bf16.msra.mxu0 %v578
    %717 = vmatprep.subr.bf16.mxu0 %v581
    %718 = vmatpush1.bf16.msra.mxu0 %v580
    %719 = vmatprep.subr.bf16.mxu0 %v583
    %720 = vmatpush1.bf16.msra.mxu0 %v582
    %721 = vmatprep.subr.bf16.mxu0 %v585
    %722 = vmatpush1.bf16.msra.mxu0 %v584
    %723 = vmatprep.subr.bf16.mxu0 %v587
    %724 = vmatpush1.bf16.msra.mxu0 %v586
    %725 = vmatprep.subr.bf16.mxu0 %v589
    %726 = vmatpush1.bf16.msra.mxu0 %v588
    %727 = vmatprep.subr.bf16.mxu0 %v591
    %728 = vmatpush1.bf16.msra.mxu0 %v590
    %729 = vmatprep.mubr.bf16.mxu0 %v259
    %730 = vmatmul.mubr.bf16.gmra.mrb[0].mxu0 %v258
    %v731 = vpop.f32.mrb[0].mxu0
    %v732 = vadd.f32 %v691, %v731
    %v733 = vpop.f32.mrb[0].mxu0
    %v734 = vadd.f32 %v693, %v733
    %v735 = vpop.f32.mrb[0].mxu0
    %v736 = vpop.f32.mrb[0].mxu0
    %737 = vdwg.mxu0
    %v738 = vmax.f32 %v732, 0.0
    %v739 = vmax.f32 %v734, 0.0
    %v740 = vpack.c.bf16 %v738, %v738
    %v741 = vpack.c.bf16 %v739, %v739
    %v742 = vld [vmem:[#allocation8] sm:$0xf]
    %v743 = vld [vmem:[#allocation8 + $0x4] sm:$0xf]
    %v744 = vld [vmem:[#allocation8 + $0x8] sm:$0xf]
    %v745 = vld [vmem:[#allocation8 + $0xc] sm:$0xf]
    %v746 = vld [vmem:[#allocation8 + $0x10] sm:$0xf]
    %v747 = vld [vmem:[#allocation8 + $0x14] sm:$0xf]
    %v748 = vld [vmem:[#allocation8 + $0x18] sm:$0xf]
    %v749 = vld [vmem:[#allocation8 + $0x1c] sm:$0xf]
    %v750 = vld [vmem:[#allocation8 + $0x20] sm:$0xf]
    %v751 = vld [vmem:[#allocation8 + $0x24] sm:$0xf]
    %v752 = vld [vmem:[#allocation8 + $0x28] sm:$0xf]
    %v753 = vld [vmem:[#allocation8 + $0x2c] sm:$0xf]
    %v754 = vld [vmem:[#allocation8 + $0x30] sm:$0xf]
    %v755 = vld [vmem:[#allocation8 + $0x34] sm:$0xf]
    %v756 = vld [vmem:[#allocation8 + $0x38] sm:$0xf]
    %v757 = vld [vmem:[#allocation8 + $0x3c] sm:$0xf]
    %v758 = vld [vmem:[#allocation8 + $0x40] sm:$0xf]
    %v759 = vld [vmem:[#allocation8 + $0x44] sm:$0xf]
    %v760 = vld [vmem:[#allocation8 + $0x48] sm:$0xf]
    %v761 = vld [vmem:[#allocation8 + $0x4c] sm:$0xf]
    %v762 = vld [vmem:[#allocation8 + $0x50] sm:$0xf]
    %v763 = vld [vmem:[#allocation8 + $0x54] sm:$0xf]
    %v764 = vld [vmem:[#allocation8 + $0x58] sm:$0xf]
    %v765 = vld [vmem:[#allocation8 + $0x5c] sm:$0xf]
    %v766 = vld [vmem:[#allocation8 + $0x60] sm:$0xf]
    %v767 = vld [vmem:[#allocation8 + $0x64] sm:$0xf]
    %v768 = vld [vmem:[#allocation8 + $0x68] sm:$0xf]
    %v769 = vld [vmem:[#allocation8 + $0x6c] sm:$0xf]
    %v770 = vld [vmem:[#allocation8 + $0x70] sm:$0xf]
    %v771 = vld [vmem:[#allocation8 + $0x74] sm:$0xf]
    %v772 = vld [vmem:[#allocation8 + $0x78] sm:$0xf]
    %v773 = vld [vmem:[#allocation8 + $0x7c] sm:$0xf]
    %v774 = vld [vmem:[%s6] sm:$0x1]
    %v776 = vlaneseq
    %v777 = vshrl.u32 %v776, 7
    %v778 = vsub.s32 0, %v777
    %v779 = vrot.slane %v774, %v778
    %v813 = vunpack.c.l.b16 %v742
    %v814 = vunpack.c.l.b16 %v743
    %v815 = vunpack.c.l.b16 %v744
    %v816 = vunpack.c.l.b16 %v745
    %v817 = vunpack.c.l.b16 %v746
    %v818 = vunpack.c.l.b16 %v747
    %v819 = vunpack.c.l.b16 %v748
    %v820 = vunpack.c.l.b16 %v749
    %v821 = vunpack.c.l.b16 %v750
    %v822 = vunpack.c.l.b16 %v751
    %v823 = vunpack.c.l.b16 %v752
    %v824 = vunpack.c.l.b16 %v753
    %v825 = vunpack.c.l.b16 %v754
    %v826 = vunpack.c.l.b16 %v755
    %v827 = vunpack.c.l.b16 %v756
    %v828 = vunpack.c.l.b16 %v757
    %v829 = vunpack.c.l.b16 %v758
    %v830 = vunpack.c.l.b16 %v759
    %v831 = vunpack.c.l.b16 %v760
    %v832 = vunpack.c.l.b16 %v761
    %v833 = vunpack.c.l.b16 %v762
    %v834 = vunpack.c.l.b16 %v763
    %v835 = vunpack.c.l.b16 %v764
    %v836 = vunpack.c.l.b16 %v765
    %v837 = vunpack.c.l.b16 %v766
    %v838 = vunpack.c.l.b16 %v767
    %v839 = vunpack.c.l.b16 %v768
    %v840 = vunpack.c.l.b16 %v769
    %v841 = vunpack.c.l.b16 %v770
    %v842 = vunpack.c.l.b16 %v771
    %v843 = vunpack.c.l.b16 %v772
    %v844 = vunpack.c.l.b16 %v773
    %v845 = vpack.c.b16 %v814, %v813
    %v846 = vpack.c.b16 %v816, %v815
    %v847 = vpack.c.b16 %v818, %v817
    %v848 = vpack.c.b16 %v820, %v819
    %v849 = vpack.c.b16 %v822, %v821
    %v850 = vpack.c.b16 %v824, %v823
    %v851 = vpack.c.b16 %v826, %v825
    %v852 = vpack.c.b16 %v828, %v827
    %v853 = vpack.c.b16 %v830, %v829
    %v854 = vpack.c.b16 %v832, %v831
    %v855 = vpack.c.b16 %v834, %v833
    %v856 = vpack.c.b16 %v836, %v835
    %v857 = vpack.c.b16 %v838, %v837
    %v858 = vpack.c.b16 %v840, %v839
    %v859 = vpack.c.b16 %v842, %v841
    %v860 = vpack.c.b16 %v844, %v843
    %877 = vmatprep.subr.bf16.mxu0 0
    %878 = vmatpush1.bf16.msra.mxu0 %v845
    %879 = vmatprep.subr.bf16.mxu0 0
    %880 = vmatpush1.bf16.msra.mxu0 %v846
    %881 = vmatprep.subr.bf16.mxu0 0
    %882 = vmatpush1.bf16.msra.mxu0 %v847
    %883 = vmatprep.subr.bf16.mxu0 0
    %884 = vmatpush1.bf16.msra.mxu0 %v848
    %885 = vmatprep.subr.bf16.mxu0 0
    %886 = vmatpush1.bf16.msra.mxu0 %v849
    %887 = vmatprep.subr.bf16.mxu0 0
    %888 = vmatpush1.bf16.msra.mxu0 %v850
    %889 = vmatprep.subr.bf16.mxu0 0
    %890 = vmatpush1.bf16.msra.mxu0 %v851
    %891 = vmatprep.subr.bf16.mxu0 0
    %892 = vmatpush1.bf16.msra.mxu0 %v852
    %893 = vmatprep.subr.bf16.mxu0 0
    %894 = vmatpush1.bf16.msra.mxu0 %v853
    %895 = vmatprep.subr.bf16.mxu0 0
    %896 = vmatpush1.bf16.msra.mxu0 %v854
    %897 = vmatprep.subr.bf16.mxu0 0
    %898 = vmatpush1.bf16.msra.mxu0 %v855
    %899 = vmatprep.subr.bf16.mxu0 0
    %900 = vmatpush1.bf16.msra.mxu0 %v856
    %901 = vmatprep.subr.bf16.mxu0 0
    %902 = vmatpush1.bf16.msra.mxu0 %v857
    %903 = vmatprep.subr.bf16.mxu0 0
    %904 = vmatpush1.bf16.msra.mxu0 %v858
    %905 = vmatprep.subr.bf16.mxu0 0
    %906 = vmatpush1.bf16.msra.mxu0 %v859
    %907 = vmatprep.subr.bf16.mxu0 0
    %908 = vmatpush1.bf16.msra.mxu0 %v860
    %909 = vmatprep.mubr.bf16.mxu0 %v741
    %910 = vmatmul.mubr.bf16.gmra.mrb[0].mxu0 %v740
    %v911 = vpop.f32.mrb[0].mxu0
    %v912 = vadd.f32 %v779, %v911
    %v913 = vpop.f32.mrb[0].mxu0
    %v914 = vpop.f32.mrb[0].mxu0
    %v915 = vpop.f32.mrb[0].mxu0
    %916 = vdwg.mxu0
    %917 = vst [vmem:[#allocation10] sm:$0xff] %v912
    // Predicated region
    $region46: #{network_forward.1} parent=1 // pred_check
      _
    $region47: #{network_forward.1} parent=1 // pred_check_branch
      %919 = sbr.rel (0) target = $region49
    $region48: #{network_forward.1} parent=1 // pred_region
      %s921 = ssub.s32 128, 128
      %922 = vsyncadd [#allocation4], %s921
      %s924 = sshll.u32 [#allocation10], 4
      %s925 = int_to_ptr.vmem [resolvable:$true] %s924
      %927 = dma.vmem_to_hbm [thread:$0]  %s925, 128, %s7, [#allocation4]
    $region49: #{network_forward.1} parent=1 // pred_fallthru
      _
    // Predicated region
    $region50: #{network_forward.1} parent=1 // pred_check
      _
    $region51: #{network_forward.1} parent=1 // pred_check_branch
      %929 = sbr.rel (0) target = $region53
    $region52: #{network_forward.1} parent=1 // pred_region
      %930 = dma.done [#allocation4], 128
    $region53: #{network_forward.1} parent=1 // pred_fallthru
      _
    %931 = vsyncpa [#allocation3], 1
    %932 = vsyncpa [#allocation6], 1
    %933 = vsyncpa [#allocation9], 1
    %934 = vsyncpa [#allocation4], 1

</llo_original>
